<compile_context>
chip_gen: v7x
topology: tpu7x:2x2x1
jax: 0.10.0
libtpu: 0.0.40
codegen_flags: <defaults>
</compile_context>

<pallas_src>
import jax
import jax.numpy as jnp
from jax.experimental import pallas as pl
from jax.experimental.pallas import tpu as pltpu


def _round_up(x, m):
    return (x + m - 1) // m * m


# ----------------------------------------------------------------------------
# Pallas kernel: CLS slice + Linear(384 -> 384)
# ----------------------------------------------------------------------------
def cls_projection_kernel(cls_ref, w_ref, b_ref, out_ref):
    # cls_ref: [TB, H] (only the CLS token of each sequence was DMA'd in)
    # w_ref:   [H, O]   b_ref: [1, O]   out_ref: [TB, O]
    proj = jnp.dot(cls_ref[...], w_ref[...],
                   preferred_element_type=jnp.float32)        # MXU, f32 acc
    out_ref[...] = (proj + b_ref[...]).astype(out_ref.dtype)


def cls_projection(hidden, w, b, *, batch_tile=512):
    """hidden: [B, S, H], w: [H, O], b: [O] -> [B, O] (f32)."""
    B, S, H = hidden.shape
    O = w.shape[1]

    # [B, S, H] -> [B, S*H]: row-major reshape (no copy).  The first H columns
    # of each row are exactly hidden[b, 0, :] (the CLS token), so the
    # BlockSpec below only moves the CLS rows HBM -> VMEM.
    hidden2d = hidden.reshape(B, S * H)

    # Pad batch to a sublane multiple (8) so output stores are full unmasked
    # vst's, and pick a batch tile (multiple of 8) so the grid divides evenly.
    TB = max(8, _round_up(min(batch_tile, _round_up(B, 8)), 8))
    B_pad = _round_up(B, TB)
    if B_pad != B:
        hidden2d = jnp.pad(hidden2d, ((0, B_pad - B), (0, 0)))

    b2d = b.reshape(1, O)

    out = pl.pallas_call(
        cls_projection_kernel,
        out_shape=jax.ShapeDtypeStruct((B_pad, O), jnp.float32),
        grid_spec=pl.GridSpec(
            grid=(B_pad // TB,),
            in_specs=[
                # Block column 0 of the [B, S*H] view == CLS token of each row.
                pl.BlockSpec((TB, H), lambda i: (i, 0)),
                pl.BlockSpec((H, O), lambda i: (0, 0)),
                pl.BlockSpec((1, O), lambda i: (0, 0)),
            ],
            out_specs=pl.BlockSpec((TB, O), lambda i: (i, 0)),
        ),
        compiler_params=pltpu.CompilerParams(
            dimension_semantics=("parallel",)),   # megacore split on v7x
    )(hidden2d, w, b2d)

    return out[:B]


# ----------------------------------------------------------------------------
# Deterministic synthetic "base_model" (glue, plain JAX)
# ----------------------------------------------------------------------------
def synthetic_base_model(params, input_ids, attention_mask, token_type_ids):
    """Produces a [B, S, 384] hidden state deterministically from the inputs."""
    word = params["word_emb"][input_ids]                 # [B, S, H]
    ttype = params["type_emb"][token_type_ids]           # [B, S, H]
    pos = params["pos_emb"][None, : input_ids.shape[1]]  # [1, S, H]
    hidden = (word + ttype + pos) * attention_mask[..., None].astype(jnp.float32)
    return hidden


def init_params(key, vocab_size=100, seq_len=8, hidden=384, output_dim=384):
    k1, k2, k3, k4, k5 = jax.random.split(key, 5)
    params = {
        "word_emb": jax.random.normal(k1, (vocab_size, hidden), jnp.float32) * 0.02,
        "type_emb": jax.random.normal(k2, (2, hidden), jnp.float32) * 0.02,
        "pos_emb": jax.random.normal(k3, (seq_len, hidden), jnp.float32) * 0.02,
        # nn.Linear(384, output_dim): PyTorch weight is [out, in], bias [out].
        # Stored pre-transposed as [in, out] for the kernel's row-major matmul.
        "proj_w": jax.random.normal(k4, (hidden, output_dim), jnp.float32) * 0.05,
        "proj_b": jax.random.normal(k5, (output_dim,), jnp.float32) * 0.05,
    }
    return params


def embedding_model_forward(params, input_ids, attention_mask, token_type_ids):
    hidden = synthetic_base_model(params, input_ids, attention_mask, token_type_ids)
    return cls_projection(hidden, params["proj_w"], params["proj_b"])


if __name__ == "__main__":
    key = jax.random.PRNGKey(0)
    B, S, H, O, V = 2, 8, 384, 384, 100

    kp, ki, kt = jax.random.split(key, 3)
    params = init_params(kp, vocab_size=V, seq_len=S, hidden=H, output_dim=O)

    input_ids = jax.random.randint(ki, (B, S), 0, V, dtype=jnp.int32)
    attention_mask = jnp.ones((B, S), dtype=jnp.int32)
    token_type_ids = jax.random.randint(kt, (B, S), 0, 2, dtype=jnp.int32)

    out = embedding_model_forward(params, input_ids, attention_mask, token_type_ids)
    out = jax.block_until_ready(out)

    # Reference check against plain JAX (module semantics: CLS slice + Linear).
    hidden_ref = synthetic_base_model(params, input_ids, attention_mask, token_type_ids)
    ref = hidden_ref[:, 0, :] @ params["proj_w"] + params["proj_b"]
    assert out.shape == (B, O), out.shape
    assert jnp.allclose(out, ref, atol=1e-4, rtol=1e-4), "mismatch vs reference"

    print("KERNEL_OK")
</pallas_src>

<mosaic_0001>
module attributes {stable_mosaic.version = 11 : i64} {
  func.func @cls_projection_kernel(%arg0: i32, %arg1: memref<8x384xf32, #tpu.memory_space<vmem>>, %arg2: memref<384x384xf32, #tpu.memory_space<vmem>>, %arg3: memref<1x384xf32, #tpu.memory_space<vmem>>, %arg4: memref<8x384xf32, #tpu.memory_space<vmem>>) attributes {dimension_semantics = [#tpu.dimension_semantics<parallel>], iteration_bounds = array<i64: 1>, scalar_prefetch = 0 : i64, scratch_operands = 0 : i64, tpu.core_type = #tpu.core_type<tc>, window_params = [{transform_indices = @transform_0, window_bounds = array<i64: 8, 384>}, {pipeline_mode = #tpu.pipeline_mode<synchronous>, transform_indices = @transform_1, window_bounds = array<i64: 384, 384>}, {pipeline_mode = #tpu.pipeline_mode<synchronous>, transform_indices = @transform_2, window_bounds = array<i64: 1, 384>}, {transform_indices = @transform_3, window_bounds = array<i64: 8, 384>}]} {
    %c0 = arith.constant 0 : index
    %c0_0 = arith.constant 0 : index
    %0 = vector.load %arg1[%c0, %c0_0] : memref<8x384xf32, #tpu.memory_space<vmem>>, vector<8x384xf32>
    %c0_1 = arith.constant 0 : index
    %c0_2 = arith.constant 0 : index
    %1 = vector.load %arg2[%c0_1, %c0_2] : memref<384x384xf32, #tpu.memory_space<vmem>>, vector<384x384xf32>
    %cst = arith.constant dense<0.000000e+00> : vector<8x384xf32>
    %2 = tpu.matmul %0, %1, %cst {dimension_numbers = #tpu.dot_dimension_numbers<[1], [0], [0], [1], [0, 0, 1, 1], [], []>} : vector<8x384xf32>, vector<384x384xf32>, vector<8x384xf32> -> vector<8x384xf32>
    %c0_3 = arith.constant 0 : index
    %c0_4 = arith.constant 0 : index
    %3 = vector.load %arg3[%c0_3, %c0_4] : memref<1x384xf32, #tpu.memory_space<vmem>>, vector<1x384xf32>
    %4 = vector.broadcast %3 : vector<1x384xf32> to vector<8x384xf32>
    %5 = arith.addf %2, %4 : vector<8x384xf32>
    %c0_5 = arith.constant 0 : index
    %c0_6 = arith.constant 0 : index
    %6 = vector.load %arg4[%c0_5, %c0_6] : memref<8x384xf32, #tpu.memory_space<vmem>>, vector<8x384xf32>
    tpu.vector_store %arg4[%c0_5, %c0_6], %5 {strides = array<i32>} : memref<8x384xf32, #tpu.memory_space<vmem>>, vector<8x384xf32>,
    return
  }
  func.func @transform_0(%arg0: i32) -> (i32, i32) {
    %c0_i32 = arith.constant 0 : i32
    %c0_i32_0 = arith.constant 0 : i32
    return %arg0, %c0_i32 : i32, i32
  }
  func.func @transform_1(%arg0: i32) -> (i32, i32) {
    %c0_i32 = arith.constant 0 : i32
    %c0_i32_0 = arith.constant 0 : i32
    %c0_i32_1 = arith.constant 0 : i32
    return %c0_i32, %c0_i32_0 : i32, i32
  }
  func.func @transform_2(%arg0: i32) -> (i32, i32) {
    %c0_i32 = arith.constant 0 : i32
    %c0_i32_0 = arith.constant 0 : i32
    %c0_i32_1 = arith.constant 0 : i32
    return %c0_i32, %c0_i32_0 : i32, i32
  }
  func.func @transform_3(%arg0: i32) -> (i32, i32) {
    %c0_i32 = arith.constant 0 : i32
    %c0_i32_0 = arith.constant 0 : i32
    return %arg0, %c0_i32 : i32, i32
  }
}

</mosaic_0001>

<llo_original>
// kernel: tpu_custom_call.1
$region0: #{tpu_custom_call.1}
  #allocation0 [shape = 'u32[]', space=smem, size = 0x4, offset = 0x4, fixed_abs, tag = 'smem constant byte address 0x4 - core index']
  #allocation1 [shape = 'u32[144,128]{1,0:T(1,128)}', space=vmem, size = 0x12000, scoped, tag = 'internal scratch']
  %s0 = inlined_call_operand.hbm [shape: f32[8,3072], index: 0, kind: input, shape index: {}]
  %s1 = inlined_call_operand.hbm [shape: f32[384,384], index: 1, kind: input, shape index: {}]
  %s2 = inlined_call_operand.vmem [shape: f32[1,384], index: 2, kind: input, shape index: {}]
  %s3 = inlined_call_operand.hbm [shape: f32[8,384], index: 3, kind: output, shape index: {}]
  %s4 = sld [smem:[#allocation0]]
  $region30: #{tpu_custom_call.1} parent=0
    _
  %s6 = ssub.s32 1, %s4
  %s7 = scalar_select 0, %s6, %s4
  $region1: #{tpu_custom_call.1} parent=0
    #allocation2 [shape = 'u8[12288]{0}', space=vmem, size = 0x3000, scoped, tag = 'input window, operand 0, single buffered']
    #allocation3 [shape = 's32[1]{0}', space=sflag, size = 0x4, scoped, tag = 'scoped memory for tpu_custom_call.1']
    #allocation4 [shape = 's32[1]{0}', space=sflag, size = 0x4, scoped, tag = 'scoped memory for tpu_custom_call.1']
    #allocation5 [shape = 'u8[589824]{0}', space=vmem, size = 0x90000, scoped, tag = 'input window, operand 1, single buffered']
    #allocation6 [shape = 's32[1]{0}', space=sflag, size = 0x4, scoped, tag = 'scoped memory for tpu_custom_call.1']
    #allocation7 [shape = 'u8[12288]{0}', space=vmem, size = 0x3000, scoped, tag = 'output window, operand 0, single buffered']
    %8 = vsyncpa [#allocation3], 0
    %9 = vsyncpa [#allocation6], 0
    %10 = vsyncpa [#allocation4], 0
    // Predicated region
    $region2: #{tpu_custom_call.1} parent=1 // pred_check
      _
    $region3: #{tpu_custom_call.1} parent=1 // pred_check_branch
      %12 = sbr.rel (0) target = $region5
    $region4: #{tpu_custom_call.1} parent=1 // pred_region
      %s14 = ssub.s32 384, 384
      %15 = vsyncadd [#allocation3], %s14
      %s17 = sshll.u32 [#allocation2], 4
      %s18 = int_to_ptr.vmem [resolvable:$true] %s17
      %20 = dma.hbm_to_vmem [thread:$0]  %s0, 384, %s18, [#allocation3]
    $region5: #{tpu_custom_call.1} parent=1 // pred_fallthru
      _
    // Predicated region
    $region6: #{tpu_custom_call.1} parent=1 // pred_check
      _
    $region7: #{tpu_custom_call.1} parent=1 // pred_check_branch
      %22 = sbr.rel (0) target = $region9
    $region8: #{tpu_custom_call.1} parent=1 // pred_region
      %s24 = ssub.s32 18432, 18432
      %25 = vsyncadd [#allocation6], %s24
      %s26 = sshll.u32 [#allocation5], 4
      %s27 = int_to_ptr.vmem [resolvable:$true] %s26
      %32 = dma.hbm_to_vmem [thread:$0]  %s1, 18432, %s27, [#allocation6], 384, 384, 24
    $region9: #{tpu_custom_call.1} parent=1 // pred_fallthru
      _
    // Predicated region
    $region10: #{tpu_custom_call.1} parent=1 // pred_check
      _
    $region11: #{tpu_custom_call.1} parent=1 // pred_check_branch
      %34 = sbr.rel (0) target = $region13
    $region12: #{tpu_custom_call.1} parent=1 // pred_region
      _
    $region13: #{tpu_custom_call.1} parent=1 // pred_fallthru
      _
    // Predicated region
    $region14: #{tpu_custom_call.1} parent=1 // pred_check
      _
    $region15: #{tpu_custom_call.1} parent=1 // pred_check_branch
      %36 = sbr.rel (0) target = $region17
    $region16: #{tpu_custom_call.1} parent=1 // pred_region
      %37 = dma.done [#allocation3], 384
    $region17: #{tpu_custom_call.1} parent=1 // pred_fallthru
      _
    // Predicated region
    $region18: #{tpu_custom_call.1} parent=1 // pred_check
      _
    $region19: #{tpu_custom_call.1} parent=1 // pred_check_branch
      %39 = sbr.rel (0) target = $region21
    $region20: #{tpu_custom_call.1} parent=1 // pred_region
      %40 = dma.done [#allocation6], 18432
    $region21: #{tpu_custom_call.1} parent=1 // pred_fallthru
      _
    %v41 = vld [vmem:[#allocation2] sm:$0xff]
    %v42 = vld [vmem:[#allocation2 + $0x8] sm:$0xff]
    %v43 = vld [vmem:[#allocation2 + $0x10] sm:$0xff]
    %v44 = vld [vmem:[#allocation5] sm:$0xff]
    %v45 = vld [vmem:[#allocation5 + $0x8] sm:$0xff]
    %v46 = vld [vmem:[#allocation5 + $0x10] sm:$0xff]
    %v47 = vld [vmem:[#allocation5 + $0x18] sm:$0xff]
    %v48 = vld [vmem:[#allocation5 + $0x20] sm:$0xff]
    %v49 = vld [vmem:[#allocation5 + $0x28] sm:$0xff]
    %v50 = vld [vmem:[#allocation5 + $0x30] sm:$0xff]
    %v51 = vld [vmem:[#allocation5 + $0x38] sm:$0xff]
    %v52 = vld [vmem:[#allocation5 + $0x40] sm:$0xff]
    %v53 = vld [vmem:[#allocation5 + $0x48] sm:$0xff]
    %v54 = vld [vmem:[#allocation5 + $0x50] sm:$0xff]
    %v55 = vld [vmem:[#allocation5 + $0x58] sm:$0xff]
    %v56 = vld [vmem:[#allocation5 + $0x60] sm:$0xff]
    %v57 = vld [vmem:[#allocation5 + $0x68] sm:$0xff]
    %v58 = vld [vmem:[#allocation5 + $0x70] sm:$0xff]
    %v59 = vld [vmem:[#allocation5 + $0x78] sm:$0xff]
    %v60 = vld [vmem:[#allocation5 + $0x80] sm:$0xff]
    %v61 = vld [vmem:[#allocation5 + $0x88] sm:$0xff]
    %v62 = vld [vmem:[#allocation5 + $0x90] sm:$0xff]
    %v63 = vld [vmem:[#allocation5 + $0x98] sm:$0xff]
    %v64 = vld [vmem:[#allocation5 + $0xa0] sm:$0xff]
    %v65 = vld [vmem:[#allocation5 + $0xa8] sm:$0xff]
    %v66 = vld [vmem:[#allocation5 + $0xb0] sm:$0xff]
    %v67 = vld [vmem:[#allocation5 + $0xb8] sm:$0xff]
    %v68 = vld [vmem:[#allocation5 + $0xc0] sm:$0xff]
    %v69 = vld [vmem:[#allocation5 + $0xc8] sm:$0xff]
    %v70 = vld [vmem:[#allocation5 + $0xd0] sm:$0xff]
    %v71 = vld [vmem:[#allocation5 + $0xd8] sm:$0xff]
    %v72 = vld [vmem:[#allocation5 + $0xe0] sm:$0xff]
    %v73 = vld [vmem:[#allocation5 + $0xe8] sm:$0xff]
    %v74 = vld [vmem:[#allocation5 + $0xf0] sm:$0xff]
    %v75 = vld [vmem:[#allocation5 + $0xf8] sm:$0xff]
    %v76 = vld [vmem:[#allocation5 + $0x100] sm:$0xff]
    %v77 = vld [vmem:[#allocation5 + $0x108] sm:$0xff]
    %v78 = vld [vmem:[#allocation5 + $0x110] sm:$0xff]
    %v79 = vld [vmem:[#allocation5 + $0x118] sm:$0xff]
    %v80 = vld [vmem:[#allocation5 + $0x120] sm:$0xff]
    %v81 = vld [vmem:[#allocation5 + $0x128] sm:$0xff]
    %v82 = vld [vmem:[#allocation5 + $0x130] sm:$0xff]
    %v83 = vld [vmem:[#allocation5 + $0x138] sm:$0xff]
    %v84 = vld [vmem:[#allocation5 + $0x140] sm:$0xff]
    %v85 = vld [vmem:[#allocation5 + $0x148] sm:$0xff]
    %v86 = vld [vmem:[#allocation5 + $0x150] sm:$0xff]
    %v87 = vld [vmem:[#allocation5 + $0x158] sm:$0xff]
    %v88 = vld [vmem:[#allocation5 + $0x160] sm:$0xff]
    %v89 = vld [vmem:[#allocation5 + $0x168] sm:$0xff]
    %v90 = vld [vmem:[#allocation5 + $0x170] sm:$0xff]
    %v91 = vld [vmem:[#allocation5 + $0x178] sm:$0xff]
    %v92 = vld [vmem:[#allocation5 + $0x180] sm:$0xff]
    %v93 = vld [vmem:[#allocation5 + $0x188] sm:$0xff]
    %v94 = vld [vmem:[#allocation5 + $0x190] sm:$0xff]
    %v95 = vld [vmem:[#allocation5 + $0x198] sm:$0xff]
    %v96 = vld [vmem:[#allocation5 + $0x1a0] sm:$0xff]
    %v97 = vld [vmem:[#allocation5 + $0x1a8] sm:$0xff]
    %v98 = vld [vmem:[#allocation5 + $0x1b0] sm:$0xff]
    %v99 = vld [vmem:[#allocation5 + $0x1b8] sm:$0xff]
    %v100 = vld [vmem:[#allocation5 + $0x1c0] sm:$0xff]
    %v101 = vld [vmem:[#allocation5 + $0x1c8] sm:$0xff]
    %v102 = vld [vmem:[#allocation5 + $0x1d0] sm:$0xff]
    %v103 = vld [vmem:[#allocation5 + $0x1d8] sm:$0xff]
    %v104 = vld [vmem:[#allocation5 + $0x1e0] sm:$0xff]
    %v105 = vld [vmem:[#allocation5 + $0x1e8] sm:$0xff]
    %v106 = vld [vmem:[#allocation5 + $0x1f0] sm:$0xff]
    %v107 = vld [vmem:[#allocation5 + $0x1f8] sm:$0xff]
    %v108 = vld [vmem:[#allocation5 + $0x200] sm:$0xff]
    %v109 = vld [vmem:[#allocation5 + $0x208] sm:$0xff]
    %v110 = vld [vmem:[#allocation5 + $0x210] sm:$0xff]
    %v111 = vld [vmem:[#allocation5 + $0x218] sm:$0xff]
    %v112 = vld [vmem:[#allocation5 + $0x220] sm:$0xff]
    %v113 = vld [vmem:[#allocation5 + $0x228] sm:$0xff]
    %v114 = vld [vmem:[#allocation5 + $0x230] sm:$0xff]
    %v115 = vld [vmem:[#allocation5 + $0x238] sm:$0xff]
    %v116 = vld [vmem:[#allocation5 + $0x240] sm:$0xff]
    %v117 = vld [vmem:[#allocation5 + $0x248] sm:$0xff]
    %v118 = vld [vmem:[#allocation5 + $0x250] sm:$0xff]
    %v119 = vld [vmem:[#allocation5 + $0x258] sm:$0xff]
    %v120 = vld [vmem:[#allocation5 + $0x260] sm:$0xff]
    %v121 = vld [vmem:[#allocation5 + $0x268] sm:$0xff]
    %v122 = vld [vmem:[#allocation5 + $0x270] sm:$0xff]
    %v123 = vld [vmem:[#allocation5 + $0x278] sm:$0xff]
    %v124 = vld [vmem:[#allocation5 + $0x280] sm:$0xff]
    %v125 = vld [vmem:[#allocation5 + $0x288] sm:$0xff]
    %v126 = vld [vmem:[#allocation5 + $0x290] sm:$0xff]
    %v127 = vld [vmem:[#allocation5 + $0x298] sm:$0xff]
    %v128 = vld [vmem:[#allocation5 + $0x2a0] sm:$0xff]
    %v129 = vld [vmem:[#allocation5 + $0x2a8] sm:$0xff]
    %v130 = vld [vmem:[#allocation5 + $0x2b0] sm:$0xff]
    %v131 = vld [vmem:[#allocation5 + $0x2b8] sm:$0xff]
    %v132 = vld [vmem:[#allocation5 + $0x2c0] sm:$0xff]
    %v133 = vld [vmem:[#allocation5 + $0x2c8] sm:$0xff]
    %v134 = vld [vmem:[#allocation5 + $0x2d0] sm:$0xff]
    %v135 = vld [vmem:[#allocation5 + $0x2d8] sm:$0xff]
    %v136 = vld [vmem:[#allocation5 + $0x2e0] sm:$0xff]
    %v137 = vld [vmem:[#allocation5 + $0x2e8] sm:$0xff]
    %v138 = vld [vmem:[#allocation5 + $0x2f0] sm:$0xff]
    %v139 = vld [vmem:[#allocation5 + $0x2f8] sm:$0xff]
    %v140 = vld [vmem:[#allocation5 + $0x300] sm:$0xff]
    %v141 = vld [vmem:[#allocation5 + $0x308] sm:$0xff]
    %v142 = vld [vmem:[#allocation5 + $0x310] sm:$0xff]
    %v143 = vld [vmem:[#allocation5 + $0x318] sm:$0xff]
    %v144 = vld [vmem:[#allocation5 + $0x320] sm:$0xff]
    %v145 = vld [vmem:[#allocation5 + $0x328] sm:$0xff]
    %v146 = vld [vmem:[#allocation5 + $0x330] sm:$0xff]
    %v147 = vld [vmem:[#allocation5 + $0x338] sm:$0xff]
    %v148 = vld [vmem:[#allocation5 + $0x340] sm:$0xff]
    %v149 = vld [vmem:[#allocation5 + $0x348] sm:$0xff]
    %v150 = vld [vmem:[#allocation5 + $0x350] sm:$0xff]
    %v151 = vld [vmem:[#allocation5 + $0x358] sm:$0xff]
    %v152 = vld [vmem:[#allocation5 + $0x360] sm:$0xff]
    %v153 = vld [vmem:[#allocation5 + $0x368] sm:$0xff]
    %v154 = vld [vmem:[#allocation5 + $0x370] sm:$0xff]
    %v155 = vld [vmem:[#allocation5 + $0x378] sm:$0xff]
    %v156 = vld [vmem:[#allocation5 + $0x380] sm:$0xff]
    %v157 = vld [vmem:[#allocation5 + $0x388] sm:$0xff]
    %v158 = vld [vmem:[#allocation5 + $0x390] sm:$0xff]
    %v159 = vld [vmem:[#allocation5 + $0x398] sm:$0xff]
    %v160 = vld [vmem:[#allocation5 + $0x3a0] sm:$0xff]
    %v161 = vld [vmem:[#allocation5 + $0x3a8] sm:$0xff]
    %v162 = vld [vmem:[#allocation5 + $0x3b0] sm:$0xff]
    %v163 = vld [vmem:[#allocation5 + $0x3b8] sm:$0xff]
    %v164 = vld [vmem:[#allocation5 + $0x3c0] sm:$0xff]
    %v165 = vld [vmem:[#allocation5 + $0x3c8] sm:$0xff]
    %v166 = vld [vmem:[#allocation5 + $0x3d0] sm:$0xff]
    %v167 = vld [vmem:[#allocation5 + $0x3d8] sm:$0xff]
    %v168 = vld [vmem:[#allocation5 + $0x3e0] sm:$0xff]
    %v169 = vld [vmem:[#allocation5 + $0x3e8] sm:$0xff]
    %v170 = vld [vmem:[#allocation5 + $0x3f0] sm:$0xff]
    %v171 = vld [vmem:[#allocation5 + $0x3f8] sm:$0xff]
    %v172 = vld [vmem:[#allocation5 + $0x400] sm:$0xff]
    %v173 = vld [vmem:[#allocation5 + $0x408] sm:$0xff]
    %v174 = vld [vmem:[#allocation5 + $0x410] sm:$0xff]
    %v175 = vld [vmem:[#allocation5 + $0x418] sm:$0xff]
    %v176 = vld [vmem:[#allocation5 + $0x420] sm:$0xff]
    %v177 = vld [vmem:[#allocation5 + $0x428] sm:$0xff]
    %v178 = vld [vmem:[#allocation5 + $0x430] sm:$0xff]
    %v179 = vld [vmem:[#allocation5 + $0x438] sm:$0xff]
    %v180 = vld [vmem:[#allocation5 + $0x440] sm:$0xff]
    %v181 = vld [vmem:[#allocation5 + $0x448] sm:$0xff]
    %v182 = vld [vmem:[#allocation5 + $0x450] sm:$0xff]
    %v183 = vld [vmem:[#allocation5 + $0x458] sm:$0xff]
    %v184 = vld [vmem:[#allocation5 + $0x460] sm:$0xff]
    %v185 = vld [vmem:[#allocation5 + $0x468] sm:$0xff]
    %v186 = vld [vmem:[#allocation5 + $0x470] sm:$0xff]
    %v187 = vld [vmem:[#allocation5 + $0x478] sm:$0xff]
    %v188 = vld [vmem:[%s2] sm:$0x7]
    %v190 = vlaneseq
    %v191 = vshrl.u32 %v190, 7
    %v192 = vsub.s32 0, %v191
    %v193 = vrot.slane %v188, %v192
    %v194 = vlaneseq
    %v195 = vshrl.u32 %v194, 7
    %v196 = vsub.s32 1, %v195
    %v197 = vrot.slane %v188, %v196
    %v198 = vlaneseq
    %v199 = vshrl.u32 %v198, 7
    %v200 = vsub.s32 2, %v199
    %v201 = vrot.slane %v188, %v200
    %205 = vmatprep.subr.mxu0 %v45
    %206 = vmatpush1.msra.mxu0 %v44
    %207 = vmatprep.subr.mxu0 %v48
    %208 = vmatpush1.msra.mxu0 %v47
    %209 = vmatprep.subr.mxu0 %v51
    %210 = vmatpush1.msra.mxu0 %v50
    %211 = vmatprep.subr.mxu0 %v54
    %212 = vmatpush1.msra.mxu0 %v53
    %213 = vmatprep.subr.mxu0 %v57
    %214 = vmatpush1.msra.mxu0 %v56
    %215 = vmatprep.subr.mxu0 %v60
    %216 = vmatpush1.msra.mxu0 %v59
    %217 = vmatprep.subr.mxu0 %v63
    %218 = vmatpush1.msra.mxu0 %v62
    %219 = vmatprep.subr.mxu0 %v66
    %220 = vmatpush1.msra.mxu0 %v65
    %221 = vmatprep.subr.mxu0 %v69
    %222 = vmatpush1.msra.mxu0 %v68
    %223 = vmatprep.subr.mxu0 %v72
    %224 = vmatpush1.msra.mxu0 %v71
    %225 = vmatprep.subr.mxu0 %v75
    %226 = vmatpush1.msra.mxu0 %v74
    %227 = vmatprep.subr.mxu0 %v78
    %228 = vmatpush1.msra.mxu0 %v77
    %229 = vmatprep.subr.mxu0 %v81
    %230 = vmatpush1.msra.mxu0 %v80
    %231 = vmatprep.subr.mxu0 %v84
    %232 = vmatpush1.msra.mxu0 %v83
    %233 = vmatprep.subr.mxu0 %v87
    %234 = vmatpush1.msra.mxu0 %v86
    %235 = vmatprep.subr.mxu0 %v90
    %236 = vmatpush1.msra.mxu0 %v89
    %237 = vmatprep.subr.mxu0 %v93
    %238 = vmatpush1.msra.mxu0 %v92
    %239 = vmatprep.subr.mxu0 %v96
    %240 = vmatpush1.msra.mxu0 %v95
    %241 = vmatprep.subr.mxu0 %v99
    %242 = vmatpush1.msra.mxu0 %v98
    %243 = vmatprep.subr.mxu0 %v102
    %244 = vmatpush1.msra.mxu0 %v101
    %245 = vmatprep.subr.mxu0 %v105
    %246 = vmatpush1.msra.mxu0 %v104
    %247 = vmatprep.subr.mxu0 %v108
    %248 = vmatpush1.msra.mxu0 %v107
    %249 = vmatprep.subr.mxu0 %v111
    %250 = vmatpush1.msra.mxu0 %v110
    %251 = vmatprep.subr.mxu0 %v114
    %252 = vmatpush1.msra.mxu0 %v113
    %253 = vmatprep.subr.mxu0 %v117
    %254 = vmatpush1.msra.mxu0 %v116
    %255 = vmatprep.subr.mxu0 %v120
    %256 = vmatpush1.msra.mxu0 %v119
    %257 = vmatprep.subr.mxu0 %v123
    %258 = vmatpush1.msra.mxu0 %v122
    %259 = vmatprep.subr.mxu0 %v126
    %260 = vmatpush1.msra.mxu0 %v125
    %261 = vmatprep.subr.mxu0 %v129
    %262 = vmatpush1.msra.mxu0 %v128
    %263 = vmatprep.subr.mxu0 %v132
    %264 = vmatpush1.msra.mxu0 %v131
    %265 = vmatprep.subr.mxu0 %v135
    %266 = vmatpush1.msra.mxu0 %v134
    %267 = vmatprep.subr.mxu0 %v138
    %268 = vmatpush1.msra.mxu0 %v137
    %269 = vmatprep.mubr.f32.mxu0 %v42
    %270 = vmatmul.mubr.f32.gmra.mrb[0].mxu0 %v41
    %v271 = vpop.f32.mrb[0].mxu0
    %v272 = vadd.f32 %v193, %v271
    %v273 = vpop.f32.mrb[0].mxu0
    %v274 = vadd.f32 %v197, %v273
    %275 = vdwg.mxu0
    %276 = vmatprep.subr.mxu0 %v141
    %277 = vmatpush1.msra.mxu0 %v140
    %278 = vmatprep.subr.mxu0 %v144
    %279 = vmatpush1.msra.mxu0 %v143
    %280 = vmatprep.subr.mxu0 %v147
    %281 = vmatpush1.msra.mxu0 %v146
    %282 = vmatprep.subr.mxu0 %v150
    %283 = vmatpush1.msra.mxu0 %v149
    %284 = vmatprep.subr.mxu0 %v153
    %285 = vmatpush1.msra.mxu0 %v152
    %286 = vmatprep.subr.mxu0 %v156
    %287 = vmatpush1.msra.mxu0 %v155
    %288 = vmatprep.subr.mxu0 %v159
    %289 = vmatpush1.msra.mxu0 %v158
    %290 = vmatprep.subr.mxu0 %v162
    %291 = vmatpush1.msra.mxu0 %v161
    %292 = vmatprep.subr.mxu0 %v165
    %293 = vmatpush1.msra.mxu0 %v164
    %294 = vmatprep.subr.mxu0 %v168
    %295 = vmatpush1.msra.mxu0 %v167
    %296 = vmatprep.subr.mxu0 %v171
    %297 = vmatpush1.msra.mxu0 %v170
    %298 = vmatprep.subr.mxu0 %v174
    %299 = vmatpush1.msra.mxu0 %v173
    %300 = vmatprep.subr.mxu0 %v177
    %301 = vmatpush1.msra.mxu0 %v176
    %302 = vmatprep.subr.mxu0 %v180
    %303 = vmatpush1.msra.mxu0 %v179
    %304 = vmatprep.subr.mxu0 %v183
    %305 = vmatpush1.msra.mxu0 %v182
    %306 = vmatprep.subr.mxu0 %v186
    %307 = vmatpush1.msra.mxu0 %v185
    %308 = vmatprep.subr.mxu0 0.0
    %309 = vmatpush1.msra.mxu0 0.0
    %310 = vmatprep.subr.mxu0 0.0
    %311 = vmatpush1.msra.mxu0 0.0
    %312 = vmatprep.subr.mxu0 0.0
    %313 = vmatpush1.msra.mxu0 0.0
    %314 = vmatprep.subr.mxu0 0.0
    %315 = vmatpush1.msra.mxu0 0.0
    %316 = vmatprep.subr.mxu0 0.0
    %317 = vmatpush1.msra.mxu0 0.0
    %318 = vmatprep.subr.mxu0 0.0
    %319 = vmatpush1.msra.mxu0 0.0
    %320 = vmatprep.subr.mxu0 0.0
    %321 = vmatpush1.msra.mxu0 0.0
    %322 = vmatprep.subr.mxu0 0.0
    %323 = vmatpush1.msra.mxu0 0.0
    %324 = vmatprep.subr.mxu0 0.0
    %325 = vmatpush1.msra.mxu0 0.0
    %326 = vmatprep.subr.mxu0 0.0
    %327 = vmatpush1.msra.mxu0 0.0
    %328 = vmatprep.subr.mxu0 0.0
    %329 = vmatpush1.msra.mxu0 0.0
    %330 = vmatprep.subr.mxu0 0.0
    %331 = vmatpush1.msra.mxu0 0.0
    %332 = vmatprep.subr.mxu0 0.0
    %333 = vmatpush1.msra.mxu0 0.0
    %334 = vmatprep.subr.mxu0 0.0
    %335 = vmatpush1.msra.mxu0 0.0
    %336 = vmatprep.subr.mxu0 0.0
    %337 = vmatpush1.msra.mxu0 0.0
    %338 = vmatprep.subr.mxu0 0.0
    %339 = vmatpush1.msra.mxu0 0.0
    %340 = vmatprep.mubr.f32.mxu0 0.0
    %341 = vmatmul.mubr.f32.gmra.mrb[0].mxu0 %v43
    %v342 = vpop.f32.mrb[0].mxu0
    %v343 = vadd.f32 %v272, %v342
    %v344 = vpop.f32.mrb[0].mxu0
    %v345 = vadd.f32 %v274, %v344
    %346 = vdwg.mxu0
    %347 = vmatprep.subr.mxu0 0.0
    %348 = vmatpush1.msra.mxu0 %v46
    %349 = vmatprep.subr.mxu0 0.0
    %350 = vmatpush1.msra.mxu0 %v49
    %351 = vmatprep.subr.mxu0 0.0
    %352 = vmatpush1.msra.mxu0 %v52
    %353 = vmatprep.subr.mxu0 0.0
    %354 = vmatpush1.msra.mxu0 %v55
    %355 = vmatprep.subr.mxu0 0.0
    %356 = vmatpush1.msra.mxu0 %v58
    %357 = vmatprep.subr.mxu0 0.0
    %358 = vmatpush1.msra.mxu0 %v61
    %359 = vmatprep.subr.mxu0 0.0
    %360 = vmatpush1.msra.mxu0 %v64
    %361 = vmatprep.subr.mxu0 0.0
    %362 = vmatpush1.msra.mxu0 %v67
    %363 = vmatprep.subr.mxu0 0.0
    %364 = vmatpush1.msra.mxu0 %v70
    %365 = vmatprep.subr.mxu0 0.0
    %366 = vmatpush1.msra.mxu0 %v73
    %367 = vmatprep.subr.mxu0 0.0
    %368 = vmatpush1.msra.mxu0 %v76
    %369 = vmatprep.subr.mxu0 0.0
    %370 = vmatpush1.msra.mxu0 %v79
    %371 = vmatprep.subr.mxu0 0.0
    %372 = vmatpush1.msra.mxu0 %v82
    %373 = vmatprep.subr.mxu0 0.0
    %374 = vmatpush1.msra.mxu0 %v85
    %375 = vmatprep.subr.mxu0 0.0
    %376 = vmatpush1.msra.mxu0 %v88
    %377 = vmatprep.subr.mxu0 0.0
    %378 = vmatpush1.msra.mxu0 %v91
    %379 = vmatprep.subr.mxu0 0.0
    %380 = vmatpush1.msra.mxu0 %v94
    %381 = vmatprep.subr.mxu0 0.0
    %382 = vmatpush1.msra.mxu0 %v97
    %383 = vmatprep.subr.mxu0 0.0
    %384 = vmatpush1.msra.mxu0 %v100
    %385 = vmatprep.subr.mxu0 0.0
    %386 = vmatpush1.msra.mxu0 %v103
    %387 = vmatprep.subr.mxu0 0.0
    %388 = vmatpush1.msra.mxu0 %v106
    %389 = vmatprep.subr.mxu0 0.0
    %390 = vmatpush1.msra.mxu0 %v109
    %391 = vmatprep.subr.mxu0 0.0
    %392 = vmatpush1.msra.mxu0 %v112
    %393 = vmatprep.subr.mxu0 0.0
    %394 = vmatpush1.msra.mxu0 %v115
    %395 = vmatprep.subr.mxu0 0.0
    %396 = vmatpush1.msra.mxu0 %v118
    %397 = vmatprep.subr.mxu0 0.0
    %398 = vmatpush1.msra.mxu0 %v121
    %399 = vmatprep.subr.mxu0 0.0
    %400 = vmatpush1.msra.mxu0 %v124
    %401 = vmatprep.subr.mxu0 0.0
    %402 = vmatpush1.msra.mxu0 %v127
    %403 = vmatprep.subr.mxu0 0.0
    %404 = vmatpush1.msra.mxu0 %v130
    %405 = vmatprep.subr.mxu0 0.0
    %406 = vmatpush1.msra.mxu0 %v133
    %407 = vmatprep.subr.mxu0 0.0
    %408 = vmatpush1.msra.mxu0 %v136
    %409 = vmatprep.subr.mxu0 0.0
    %410 = vmatpush1.msra.mxu0 %v139
    %411 = vmatprep.mubr.f32.mxu0 %v42
    %412 = vmatmul.mubr.f32.gmra.mrb[0].mxu0 %v41
    %v413 = vpop.f32.mrb[0].mxu0
    %v414 = vadd.f32 %v201, %v413
    %v415 = vpop.f32.mrb[0].mxu0
    %416 = vdwg.mxu0
    %417 = vmatprep.subr.mxu0 0.0
    %418 = vmatpush1.msra.mxu0 %v142
    %419 = vmatprep.subr.mxu0 0.0
    %420 = vmatpush1.msra.mxu0 %v145
    %421 = vmatprep.subr.mxu0 0.0
    %422 = vmatpush1.msra.mxu0 %v148
    %423 = vmatprep.subr.mxu0 0.0
    %424 = vmatpush1.msra.mxu0 %v151
    %425 = vmatprep.subr.mxu0 0.0
    %426 = vmatpush1.msra.mxu0 %v154
    %427 = vmatprep.subr.mxu0 0.0
    %428 = vmatpush1.msra.mxu0 %v157
    %429 = vmatprep.subr.mxu0 0.0
    %430 = vmatpush1.msra.mxu0 %v160
    %431 = vmatprep.subr.mxu0 0.0
    %432 = vmatpush1.msra.mxu0 %v163
    %433 = vmatprep.subr.mxu0 0.0
    %434 = vmatpush1.msra.mxu0 %v166
    %435 = vmatprep.subr.mxu0 0.0
    %436 = vmatpush1.msra.mxu0 %v169
    %437 = vmatprep.subr.mxu0 0.0
    %438 = vmatpush1.msra.mxu0 %v172
    %439 = vmatprep.subr.mxu0 0.0
    %440 = vmatpush1.msra.mxu0 %v175
    %441 = vmatprep.subr.mxu0 0.0
    %442 = vmatpush1.msra.mxu0 %v178
    %443 = vmatprep.subr.mxu0 0.0
    %444 = vmatpush1.msra.mxu0 %v181
    %445 = vmatprep.subr.mxu0 0.0
    %446 = vmatpush1.msra.mxu0 %v184
    %447 = vmatprep.subr.mxu0 0.0
    %448 = vmatpush1.msra.mxu0 %v187
    %449 = vmatprep.subr.mxu0 0.0
    %450 = vmatpush1.msra.mxu0 0.0
    %451 = vmatprep.subr.mxu0 0.0
    %452 = vmatpush1.msra.mxu0 0.0
    %453 = vmatprep.subr.mxu0 0.0
    %454 = vmatpush1.msra.mxu0 0.0
    %455 = vmatprep.subr.mxu0 0.0
    %456 = vmatpush1.msra.mxu0 0.0
    %457 = vmatprep.subr.mxu0 0.0
    %458 = vmatpush1.msra.mxu0 0.0
    %459 = vmatprep.subr.mxu0 0.0
    %460 = vmatpush1.msra.mxu0 0.0
    %461 = vmatprep.subr.mxu0 0.0
    %462 = vmatpush1.msra.mxu0 0.0
    %463 = vmatprep.subr.mxu0 0.0
    %464 = vmatpush1.msra.mxu0 0.0
    %465 = vmatprep.subr.mxu0 0.0
    %466 = vmatpush1.msra.mxu0 0.0
    %467 = vmatprep.subr.mxu0 0.0
    %468 = vmatpush1.msra.mxu0 0.0
    %469 = vmatprep.subr.mxu0 0.0
    %470 = vmatpush1.msra.mxu0 0.0
    %471 = vmatprep.subr.mxu0 0.0
    %472 = vmatpush1.msra.mxu0 0.0
    %473 = vmatprep.subr.mxu0 0.0
    %474 = vmatpush1.msra.mxu0 0.0
    %475 = vmatprep.subr.mxu0 0.0
    %476 = vmatpush1.msra.mxu0 0.0
    %477 = vmatprep.subr.mxu0 0.0
    %478 = vmatpush1.msra.mxu0 0.0
    %479 = vmatprep.subr.mxu0 0.0
    %480 = vmatpush1.msra.mxu0 0.0
    %481 = vmatprep.mubr.f32.mxu0 0.0
    %482 = vmatmul.mubr.f32.gmra.mrb[0].mxu0 %v43
    %v483 = vpop.f32.mrb[0].mxu0
    %v484 = vadd.f32 %v414, %v483
    %v485 = vpop.f32.mrb[0].mxu0
    %486 = vdwg.mxu0
    %487 = vst [vmem:[#allocation7] sm:$0xff] %v343
    %488 = vst [vmem:[#allocation7 + $0x8] sm:$0xff] %v345
    %489 = vst [vmem:[#allocation7 + $0x10] sm:$0xff] %v484
    // Predicated region
    $region22: #{tpu_custom_call.1} parent=1 // pred_check
      _
    $region23: #{tpu_custom_call.1} parent=1 // pred_check_branch
      %491 = sbr.rel (0) target = $region25
    $region24: #{tpu_custom_call.1} parent=1 // pred_region
      %s493 = ssub.s32 384, 384
      %494 = vsyncadd [#allocation4], %s493
      %s496 = sshll.u32 [#allocation7], 4
      %s497 = int_to_ptr.vmem [resolvable:$true] %s496
      %499 = dma.vmem_to_hbm [thread:$0]  %s497, 384, %s3, [#allocation4]
    $region25: #{tpu_custom_call.1} parent=1 // pred_fallthru
      _
    // Predicated region
    $region26: #{tpu_custom_call.1} parent=1 // pred_check
      _
    $region27: #{tpu_custom_call.1} parent=1 // pred_check_branch
      %501 = sbr.rel (0) target = $region29
    $region28: #{tpu_custom_call.1} parent=1 // pred_region
      %502 = dma.done [#allocation4], 384
    $region29: #{tpu_custom_call.1} parent=1 // pred_fallthru
      _
    %503 = vsyncpa [#allocation3], 1
    %504 = vsyncpa [#allocation6], 1
    %505 = vsyncpa [#allocation4], 1

</llo_original>
